<compile_context>
chip_gen: v7x
topology: tpu7x:2x2x1
jax: 0.10.0
libtpu: 0.0.40
codegen_flags: <defaults>
</compile_context>

<pallas_src>
import jax
import jax.numpy as jnp
from jax.experimental import pallas as pl
from jax.experimental.pallas import tpu as pltpu


def _linear_kernel(x_ref, wb_ref, o_ref):
    # x_ref : [TB, 1]            (batch tile, single input feature)
    # wb_ref: [2, output_dim]    row 0 = weight (input feature 0), row 1 = bias
    # o_ref : [TB, output_dim]
    w = wb_ref[0:1, :]          # [1, output_dim]  static slice -> view, no copy
    b = wb_ref[1:2, :]          # [1, output_dim]
    # Pure VPU broadcast multiply-add; no MXU involvement.
    o_ref[...] = x_ref[...] * w + b


def linear_classifier(x, weight, bias, *, max_block_rows=8192):
    """Forward pass of LinearClassifier.

    x:      [B, input_dim]           float32 (input_dim must be 1, per the module)
    weight: [output_dim, input_dim]  (PyTorch nn.Linear layout)
    bias:   [output_dim]
    returns [B, output_dim]
    """
    B, input_dim = x.shape
    output_dim, in_dim_w = weight.shape
    assert input_dim == 1 and in_dim_w == 1, "kernel is specialized for input_dim == 1"

    # Fold weight row + bias into one tiny resident block.
    wb = jnp.concatenate(
        [weight[:, 0].reshape(1, output_dim), bias.reshape(1, output_dim)], axis=0
    ).astype(x.dtype)  # [2, output_dim]

    # Batch tile: multiple of 8 (sublane alignment), capped for VMEM friendliness.
    tb = min(max_block_rows, ((B + 7) // 8) * 8)
    grid = (pl.cdiv(B, tb),)  # trailing partial block handled by masked writes

    out = pl.pallas_call(
        _linear_kernel,
        out_shape=jax.ShapeDtypeStruct((B, output_dim), x.dtype),
        grid=grid,
        in_specs=[
            pl.BlockSpec((tb, input_dim), lambda i: (i, 0)),
            pl.BlockSpec((2, output_dim), lambda i: (0, 0)),  # VMEM-resident params
        ],
        out_specs=pl.BlockSpec((tb, output_dim), lambda i: (i, 0)),
        compiler_params=pltpu.CompilerParams(
            dimension_semantics=("parallel",),  # shard batch grid across TCs (v7x)
        ),
    )(x, wb)

    return out


if __name__ == "__main__":
    input_dim = 1
    output_dim = 5
    batch = 8

    key = jax.random.PRNGKey(0)
    kx, kw, kb = jax.random.split(key, 3)

    # Deterministic synthetic parameters (PyTorch-style uniform(-1/sqrt(in), 1/sqrt(in)))
    bound = 1.0 / (input_dim ** 0.5)
    weight = jax.random.uniform(kw, (output_dim, input_dim), jnp.float32, -bound, bound)
    bias = jax.random.uniform(kb, (output_dim,), jnp.float32, -bound, bound)

    x = jax.random.normal(kx, (batch, input_dim), jnp.float32)

    y = linear_classifier(x, weight, bias)
    y = jax.block_until_ready(y)

    y_ref = x @ weight.T + bias
    assert y.shape == (batch, output_dim)
    assert jnp.allclose(y, y_ref, atol=1e-5, rtol=1e-5)

    # Secondary check: batch not a multiple of the block size (exercises the
    # masked trailing block path with a multi-step grid).
    x2 = jax.random.normal(jax.random.PRNGKey(1), (1000, input_dim), jnp.float32)
    y2 = jax.block_until_ready(
        linear_classifier(x2, weight, bias, max_block_rows=256)
    )
    assert jnp.allclose(y2, x2 @ weight.T + bias, atol=1e-5, rtol=1e-5)

    print("KERNEL_OK")
</pallas_src>

<mosaic_0001>
module attributes {stable_mosaic.version = 11 : i64} {
  func.func @_linear_kernel(%arg0: i32, %arg1: memref<8x1xf32, #tpu.memory_space<vmem>>, %arg2: memref<2x5xf32, #tpu.memory_space<vmem>>, %arg3: memref<8x5xf32, #tpu.memory_space<vmem>>) attributes {dimension_semantics = [#tpu.dimension_semantics<parallel>], iteration_bounds = array<i64: 1>, scalar_prefetch = 0 : i64, scratch_operands = 0 : i64, tpu.core_type = #tpu.core_type<tc>, window_params = [{transform_indices = @transform_0, window_bounds = array<i64: 8, 1>}, {pipeline_mode = #tpu.pipeline_mode<synchronous>, transform_indices = @transform_1, window_bounds = array<i64: 2, 5>}, {transform_indices = @transform_2, window_bounds = array<i64: 8, 5>}]} {
    %c0 = arith.constant 0 : index
    %c0_0 = arith.constant 0 : index
    %0 = vector.load %arg2[%c0, %c0_0] : memref<2x5xf32, #tpu.memory_space<vmem>>, vector<1x5xf32>
    %c1 = arith.constant 1 : index
    %c0_1 = arith.constant 0 : index
    %1 = vector.load %arg2[%c1, %c0_1] : memref<2x5xf32, #tpu.memory_space<vmem>>, vector<1x5xf32>
    %c0_2 = arith.constant 0 : index
    %c0_3 = arith.constant 0 : index
    %2 = vector.load %arg1[%c0_2, %c0_3] : memref<8x1xf32, #tpu.memory_space<vmem>>, vector<8x1xf32>
    %3 = vector.broadcast %2 : vector<8x1xf32> to vector<8x5xf32>
    %4 = vector.broadcast %0 : vector<1x5xf32> to vector<8x5xf32>
    %5 = arith.mulf %3, %4 : vector<8x5xf32>
    %6 = vector.broadcast %1 : vector<1x5xf32> to vector<8x5xf32>
    %7 = arith.addf %5, %6 : vector<8x5xf32>
    %c0_4 = arith.constant 0 : index
    %c0_5 = arith.constant 0 : index
    %8 = vector.load %arg3[%c0_4, %c0_5] : memref<8x5xf32, #tpu.memory_space<vmem>>, vector<8x5xf32>
    tpu.vector_store %arg3[%c0_4, %c0_5], %7 {strides = array<i32>} : memref<8x5xf32, #tpu.memory_space<vmem>>, vector<8x5xf32>,
    return
  }
  func.func @transform_0(%arg0: i32) -> (i32, i32) {
    %c0_i32 = arith.constant 0 : i32
    %c0_i32_0 = arith.constant 0 : i32
    return %arg0, %c0_i32 : i32, i32
  }
  func.func @transform_1(%arg0: i32) -> (i32, i32) {
    %c0_i32 = arith.constant 0 : i32
    %c0_i32_0 = arith.constant 0 : i32
    %c0_i32_1 = arith.constant 0 : i32
    return %c0_i32, %c0_i32_0 : i32, i32
  }
  func.func @transform_2(%arg0: i32) -> (i32, i32) {
    %c0_i32 = arith.constant 0 : i32
    %c0_i32_0 = arith.constant 0 : i32
    return %arg0, %c0_i32 : i32, i32
  }
}

</mosaic_0001>

<llo_original>
// kernel: tpu_custom_call.1
$region0: #{tpu_custom_call.1}
  #allocation0 [shape = 'u32[]', space=smem, size = 0x4, offset = 0x4, fixed_abs, tag = 'smem constant byte address 0x4 - core index']
  #allocation1 [shape = 'u32[144,128]{1,0:T(1,128)}', space=vmem, size = 0x12000, scoped, tag = 'internal scratch']
  %s0 = inlined_call_operand.vmem [shape: f32[8,1], index: 0, kind: input, shape index: {}]
  %s1 = inlined_call_operand.vmem [shape: f32[2,5], index: 1, kind: input, shape index: {}]
  %s2 = inlined_call_operand.hbm [shape: f32[8,5], index: 2, kind: output, shape index: {}]
  %s3 = sld [smem:[#allocation0]]
  $region18: #{tpu_custom_call.1} parent=0
    _
  %s5 = ssub.s32 1, %s3
  %s6 = scalar_select 0, %s5, %s3
  $region1: #{tpu_custom_call.1} parent=0
    #allocation2 [shape = 'u8[4096]{0}', space=vmem, size = 0x1000, scoped, tag = 'output window, operand 0, single buffered']
    #allocation3 [shape = 's32[1]{0}', space=sflag, size = 0x4, scoped, tag = 'scoped memory for tpu_custom_call.1']
    %7 = vsyncpa [#allocation3], 0
    // Predicated region
    $region2: #{tpu_custom_call.1} parent=1 // pred_check
      _
    $region3: #{tpu_custom_call.1} parent=1 // pred_check_branch
      %9 = sbr.rel (0) target = $region5
    $region4: #{tpu_custom_call.1} parent=1 // pred_region
      _
    $region5: #{tpu_custom_call.1} parent=1 // pred_fallthru
      _
    // Predicated region
    $region6: #{tpu_custom_call.1} parent=1 // pred_check
      _
    $region7: #{tpu_custom_call.1} parent=1 // pred_check_branch
      %11 = sbr.rel (0) target = $region9
    $region8: #{tpu_custom_call.1} parent=1 // pred_region
      _
    $region9: #{tpu_custom_call.1} parent=1 // pred_fallthru
      _
    %v12 = vld [vmem:[%s1] sm:$0x1]
    %v13 = vld [vmem:[%s1 + $0x1] sm:$0x1]
    %v14 = vld [vmem:[%s0] sm:$0xff]
    %16 = vset.pattern.permute.xlu0 0
    %17 = vperm.xlu0 %16, %v14
    %v18 = vpop.permute.xlu0 %17
    %v20 = vlaneseq
    %v21 = vshrl.u32 %v20, 7
    %v22 = vsub.s32 0, %v21
    %v23 = vrot.slane %v12, %v22
    %v24 = vmul.f32 %v18, %v23
    %v25 = vlaneseq
    %v26 = vshrl.u32 %v25, 7
    %v27 = vsub.s32 0, %v26
    %v28 = vrot.slane %v13, %v27
    %v29 = vadd.f32 %v24, %v28
    %vm30 = vcmask 39936
    %31 = vst.msk [vmem:[#allocation2] sm:$0xff] %vm30, %v29
    // Predicated region
    $region10: #{tpu_custom_call.1} parent=1 // pred_check
      _
    $region11: #{tpu_custom_call.1} parent=1 // pred_check_branch
      %33 = sbr.rel (0) target = $region13
    $region12: #{tpu_custom_call.1} parent=1 // pred_region
      %s35 = ssub.s32 128, 128
      %36 = vsyncadd [#allocation3], %s35
      %s38 = sshll.u32 [#allocation2], 4
      %s39 = int_to_ptr.vmem [resolvable:$true] %s38
      %41 = dma.vmem_to_hbm [thread:$0]  %s39, 128, %s2, [#allocation3]
    $region13: #{tpu_custom_call.1} parent=1 // pred_fallthru
      _
    // Predicated region
    $region14: #{tpu_custom_call.1} parent=1 // pred_check
      _
    $region15: #{tpu_custom_call.1} parent=1 // pred_check_branch
      %43 = sbr.rel (0) target = $region17
    $region16: #{tpu_custom_call.1} parent=1 // pred_region
      %44 = dma.done [#allocation3], 128
    $region17: #{tpu_custom_call.1} parent=1 // pred_fallthru
      _
    %45 = vsyncpa [#allocation3], 1

</llo_original>
